<compile_context>
chip_gen: v7x
topology: tpu7x:2x2x1
jax: 0.10.0
libtpu: 0.0.40
codegen_flags: <defaults>
</compile_context>

<pallas_src>
import jax
import jax.numpy as jnp
from jax.experimental import pallas as pl
from jax.experimental.pallas import tpu as pltpu


def _to2(v):
    if isinstance(v, (tuple, list)):
        assert len(v) == 2
        return (int(v[0]), int(v[1]))
    return (int(v), int(v))


def _make_unfold_kernel(ph, pw, OH, OW):
    """Kernel body for one (batch, channel) grid step."""

    def kernel(x_ref, rsel_ref, csel_ref, o_ref, p_ref):
        # x_ref:    (Hp, Wp)          one padded channel plane
        # rsel_ref: (ph*OH, Hp)       one-hot row gather, row r = i*OH + oh
        # csel_ref: (Wp, pw*OW)       one-hot col gather, col q = j*OW + ow
        # o_ref:    (ph*pw, OH, OW)   unfolded patches for this channel
        # p_ref:    (ph*OH, pw*OW)    f32 VMEM scratch for the gathered plane
        #
        # Two fused MXU matmuls per channel:
        #   p[i*OH+oh, j*OW+ow] == x[oh*ph + i, ow*pw + j]
        # Exact because the selectors are one-hot and accumulation is f32.
        t = jnp.dot(rsel_ref[...], x_ref[...],
                    preferred_element_type=jnp.float32)            # (ph*OH, Wp)
        p_ref[...] = jnp.dot(t, csel_ref[...],
                             preferred_element_type=jnp.float32)   # (ph*OH, pw*OW)

        # Static-slice relayout (i, oh, j, ow) -> (i, j, oh, ow): pure VMEM
        # copies, zero FLOPs.  Trailing (OH, OW) dims make the wrapper reshape
        # to (B, C*ph*pw, L) free.
        for i in range(ph):
            for j in range(pw):
                o_ref[i * pw + j, :, :] = p_ref[
                    i * OH:(i + 1) * OH,
                    j * OW:(j + 1) * OW].astype(o_ref.dtype)

    return kernel


def unfold(x, patch_size, padding=0):
    """torch.nn.Unfold(kernel_size=patch_size, stride=patch_size, padding)
    applied to NCHW float input."""
    ph, pw = _to2(patch_size)
    pad_h, pad_w = _to2(padding)
    assert jnp.issubdtype(x.dtype, jnp.floating), (
        "unfold kernel supports floating-point inputs only")

    B, C, H, W = x.shape
    xp = jnp.pad(x, ((0, 0), (0, 0), (pad_h, pad_h), (pad_w, pad_w)))
    Hp, Wp = H + 2 * pad_h, W + 2 * pad_w
    OH = (Hp - ph) // ph + 1
    OW = (Wp - pw) // pw + 1
    L = OH * OW
    dt = x.dtype

    # One-hot gather matrices (setup glue), ordered so that
    #   (rsel @ x @ csel)[i*OH + oh, j*OW + ow] == x[oh*ph + i, ow*pw + j].
    r = jnp.arange(ph * OH)
    i_idx, oh_idx = r // OH, r % OH
    rsel = (jnp.arange(Hp)[None, :] ==
            (oh_idx * ph + i_idx)[:, None]).astype(dt)              # (ph*OH, Hp)
    q = jnp.arange(pw * OW)
    j_idx, ow_idx = q // OW, q % OW
    csel = (jnp.arange(Wp)[:, None] ==
            (ow_idx * pw + j_idx)[None, :]).astype(dt)              # (Wp, pw*OW)

    kernel = _make_unfold_kernel(ph, pw, OH, OW)

    elt = jnp.dtype(dt).itemsize
    cost = pl.CostEstimate(
        flops=2 * B * C * (ph * OH * Hp * Wp + ph * OH * Wp * pw * OW),
        transcendentals=0,
        bytes_accessed=(B * C * Hp * Wp                 # input read
                        + B * C * ph * pw * OH * OW     # output write
                        + ph * OH * Hp + Wp * pw * OW   # selectors (once)
                        ) * elt)

    out = pl.pallas_call(
        kernel,
        out_shape=jax.ShapeDtypeStruct((B, C * ph * pw, OH, OW), dt),
        grid=(B, C),
        in_specs=[
            # one (Hp, Wp) channel plane per step (contiguous DMA, pipelined)
            pl.BlockSpec((None, None, Hp, Wp), lambda b, c: (b, c, 0, 0)),
            # selectors: constant block index -> fetched once, stay resident
            pl.BlockSpec((ph * OH, Hp), lambda b, c: (0, 0)),
            pl.BlockSpec((Wp, pw * OW), lambda b, c: (0, 0)),
        ],
        out_specs=pl.BlockSpec((None, ph * pw, OH, OW),
                               lambda b, c: (b, c, 0, 0)),
        scratch_shapes=[pltpu.VMEM((ph * OH, pw * OW), jnp.float32)],
        compiler_params=pltpu.CompilerParams(
            dimension_semantics=("parallel", "parallel")),
        cost_estimate=cost,
    )(xp, rsel, csel)

    # Collapse (OH, OW) -> L: trailing-dims reshape of a contiguous array, free.
    return out.reshape(B, C * ph * pw, L)


def unfold_ref(x, patch_size, padding=0):
    """Pure-JAX reference matching torch.nn.Unfold semantics (verification)."""
    ph, pw = _to2(patch_size)
    pad_h, pad_w = _to2(padding)
    xp = jnp.pad(x, ((0, 0), (0, 0), (pad_h, pad_h), (pad_w, pad_w)))
    B, C, Hp, Wp = xp.shape
    OH = (Hp - ph) // ph + 1
    OW = (Wp - pw) // pw + 1
    xc = xp[:, :, :OH * ph, :OW * pw].reshape(B, C, OH, ph, OW, pw)
    xt = jnp.transpose(xc, (0, 1, 3, 5, 2, 4))   # (B, C, ph, pw, OH, OW)
    return xt.reshape(B, C * ph * pw, OH * OW)


if __name__ == "__main__":
    key = jax.random.PRNGKey(0)

    # Config 1: img_channel=3, patch_size=4, no padding.
    x1 = jax.random.normal(key, (2, 3, 16, 16), dtype=jnp.float32)
    y1 = jax.block_until_ready(unfold(x1, patch_size=4, padding=0))
    r1 = unfold_ref(x1, patch_size=4, padding=0)
    assert y1.shape == (2, 3 * 4 * 4, 16), y1.shape
    assert jnp.allclose(y1, r1), "mismatch (no padding)"

    # Config 2: exercise the padding path.
    k2 = jax.random.fold_in(key, 1)
    x2 = jax.random.normal(k2, (2, 3, 14, 14), dtype=jnp.float32)
    y2 = jax.block_until_ready(unfold(x2, patch_size=4, padding=1))
    r2 = unfold_ref(x2, patch_size=4, padding=1)
    assert y2.shape == (2, 3 * 4 * 4, 16), y2.shape
    assert jnp.allclose(y2, r2), "mismatch (with padding)"

    print("KERNEL_OK")
</pallas_src>

<mosaic_0001>
module attributes {stable_mosaic.version = 11 : i64} {
  func.func @kernel(%arg0: i32, %arg1: i32, %arg2: memref<1x1x16x16xf32, #tpu.memory_space<vmem>>, %arg3: memref<16x16xf32, #tpu.memory_space<vmem>>, %arg4: memref<16x16xf32, #tpu.memory_space<vmem>>, %arg5: memref<1x16x4x4xf32, #tpu.memory_space<vmem>>, %arg6: memref<16x16xf32, #tpu.memory_space<vmem>>) attributes {dimension_semantics = [#tpu.dimension_semantics<parallel>, #tpu.dimension_semantics<parallel>], iteration_bounds = array<i64: 2, 3>, scalar_prefetch = 0 : i64, scratch_operands = 1 : i64, tpu.core_type = #tpu.core_type<tc>, window_params = [{transform_indices = @transform_0, window_bounds = array<i64: 1, 1, 16, 16>}, {pipeline_mode = #tpu.pipeline_mode<synchronous>, transform_indices = @transform_1, window_bounds = array<i64: 16, 16>}, {pipeline_mode = #tpu.pipeline_mode<synchronous>, transform_indices = @transform_2, window_bounds = array<i64: 16, 16>}, {transform_indices = @transform_3, window_bounds = array<i64: 1, 16, 4, 4>}]} {
    %c0 = arith.constant 0 : index
    %c0_0 = arith.constant 0 : index
    %0 = vector.load %arg3[%c0, %c0_0] : memref<16x16xf32, #tpu.memory_space<vmem>>, vector<16x16xf32>
    %c0_1 = arith.constant 0 : index
    %c0_2 = arith.constant 0 : index
    %c0_3 = arith.constant 0 : index
    %c0_4 = arith.constant 0 : index
    %1 = vector.load %arg2[%c0_1, %c0_2, %c0_3, %c0_4] : memref<1x1x16x16xf32, #tpu.memory_space<vmem>>, vector<1x1x16x16xf32>
    %2 = vector.shape_cast %1 : vector<1x1x16x16xf32> to vector<16x16xf32>
    %cst = arith.constant dense<0.000000e+00> : vector<16x16xf32>
    %3 = tpu.matmul %0, %2, %cst {dimension_numbers = #tpu.dot_dimension_numbers<[1], [0], [0], [1], [0, 0, 1, 1], [], []>} : vector<16x16xf32>, vector<16x16xf32>, vector<16x16xf32> -> vector<16x16xf32>
    %c0_5 = arith.constant 0 : index
    %c0_6 = arith.constant 0 : index
    %4 = vector.load %arg4[%c0_5, %c0_6] : memref<16x16xf32, #tpu.memory_space<vmem>>, vector<16x16xf32>
    %cst_7 = arith.constant dense<0.000000e+00> : vector<16x16xf32>
    %5 = tpu.matmul %3, %4, %cst_7 {dimension_numbers = #tpu.dot_dimension_numbers<[1], [0], [0], [1], [0, 0, 1, 1], [], []>} : vector<16x16xf32>, vector<16x16xf32>, vector<16x16xf32> -> vector<16x16xf32>
    %c0_8 = arith.constant 0 : index
    %c0_9 = arith.constant 0 : index
    %6 = vector.load %arg6[%c0_8, %c0_9] : memref<16x16xf32, #tpu.memory_space<vmem>>, vector<16x16xf32>
    tpu.vector_store %arg6[%c0_8, %c0_9], %5 {strides = array<i32>} : memref<16x16xf32, #tpu.memory_space<vmem>>, vector<16x16xf32>,
    %c0_10 = arith.constant 0 : index
    %c0_11 = arith.constant 0 : index
    %7 = vector.load %arg6[%c0_10, %c0_11] : memref<16x16xf32, #tpu.memory_space<vmem>>, vector<4x4xf32>
    %c0_12 = arith.constant 0 : index
    %c0_13 = arith.constant 0 : index
    %c0_14 = arith.constant 0 : index
    %c0_15 = arith.constant 0 : index
    %8 = vector.load %arg5[%c0_12, %c0_13, %c0_14, %c0_15] : memref<1x16x4x4xf32, #tpu.memory_space<vmem>>, vector<1x1x4x4xf32>
    %9 = vector.shape_cast %8 : vector<1x1x4x4xf32> to vector<4x4xf32>
    %10 = vector.shape_cast %7 : vector<4x4xf32> to vector<1x1x4x4xf32>
    tpu.vector_store %arg5[%c0_12, %c0_13, %c0_14, %c0_15], %10 {strides = array<i32>} : memref<1x16x4x4xf32, #tpu.memory_space<vmem>>, vector<1x1x4x4xf32>,
    %c0_16 = arith.constant 0 : index
    %c4 = arith.constant 4 : index
    %11 = vector.load %arg6[%c0_16, %c4] : memref<16x16xf32, #tpu.memory_space<vmem>>, vector<4x4xf32>
    %c0_17 = arith.constant 0 : index
    %c1 = arith.constant 1 : index
    %c0_18 = arith.constant 0 : index
    %c0_19 = arith.constant 0 : index
    %12 = vector.load %arg5[%c0_17, %c1, %c0_18, %c0_19] : memref<1x16x4x4xf32, #tpu.memory_space<vmem>>, vector<1x1x4x4xf32>
    %13 = vector.shape_cast %12 : vector<1x1x4x4xf32> to vector<4x4xf32>
    %14 = vector.shape_cast %11 : vector<4x4xf32> to vector<1x1x4x4xf32>
    tpu.vector_store %arg5[%c0_17, %c1, %c0_18, %c0_19], %14 {strides = array<i32>} : memref<1x16x4x4xf32, #tpu.memory_space<vmem>>, vector<1x1x4x4xf32>,
    %c0_20 = arith.constant 0 : index
    %c8 = arith.constant 8 : index
    %15 = vector.load %arg6[%c0_20, %c8] : memref<16x16xf32, #tpu.memory_space<vmem>>, vector<4x4xf32>
    %c0_21 = arith.constant 0 : index
    %c2 = arith.constant 2 : index
    %c0_22 = arith.constant 0 : index
    %c0_23 = arith.constant 0 : index
    %16 = vector.load %arg5[%c0_21, %c2, %c0_22, %c0_23] : memref<1x16x4x4xf32, #tpu.memory_space<vmem>>, vector<1x1x4x4xf32>
    %17 = vector.shape_cast %16 : vector<1x1x4x4xf32> to vector<4x4xf32>
    %18 = vector.shape_cast %15 : vector<4x4xf32> to vector<1x1x4x4xf32>
    tpu.vector_store %arg5[%c0_21, %c2, %c0_22, %c0_23], %18 {strides = array<i32>} : memref<1x16x4x4xf32, #tpu.memory_space<vmem>>, vector<1x1x4x4xf32>,
    %c0_24 = arith.constant 0 : index
    %c12 = arith.constant 12 : index
    %19 = vector.load %arg6[%c0_24, %c12] : memref<16x16xf32, #tpu.memory_space<vmem>>, vector<4x4xf32>
    %c0_25 = arith.constant 0 : index
    %c3 = arith.constant 3 : index
    %c0_26 = arith.constant 0 : index
    %c0_27 = arith.constant 0 : index
    %20 = vector.load %arg5[%c0_25, %c3, %c0_26, %c0_27] : memref<1x16x4x4xf32, #tpu.memory_space<vmem>>, vector<1x1x4x4xf32>
    %21 = vector.shape_cast %20 : vector<1x1x4x4xf32> to vector<4x4xf32>
    %22 = vector.shape_cast %19 : vector<4x4xf32> to vector<1x1x4x4xf32>
    tpu.vector_store %arg5[%c0_25, %c3, %c0_26, %c0_27], %22 {strides = array<i32>} : memref<1x16x4x4xf32, #tpu.memory_space<vmem>>, vector<1x1x4x4xf32>,
    %c4_28 = arith.constant 4 : index
    %c0_29 = arith.constant 0 : index
    %23 = vector.load %arg6[%c4_28, %c0_29] : memref<16x16xf32, #tpu.memory_space<vmem>>, vector<4x4xf32>
    %c0_30 = arith.constant 0 : index
    %c4_31 = arith.constant 4 : index
    %c0_32 = arith.constant 0 : index
    %c0_33 = arith.constant 0 : index
    %24 = vector.load %arg5[%c0_30, %c4_31, %c0_32, %c0_33] : memref<1x16x4x4xf32, #tpu.memory_space<vmem>>, vector<1x1x4x4xf32>
    %25 = vector.shape_cast %24 : vector<1x1x4x4xf32> to vector<4x4xf32>
    %26 = vector.shape_cast %23 : vector<4x4xf32> to vector<1x1x4x4xf32>
    tpu.vector_store %arg5[%c0_30, %c4_31, %c0_32, %c0_33], %26 {strides = array<i32>} : memref<1x16x4x4xf32, #tpu.memory_space<vmem>>, vector<1x1x4x4xf32>,
    %c4_34 = arith.constant 4 : index
    %c4_35 = arith.constant 4 : index
    %27 = vector.load %arg6[%c4_34, %c4_35] : memref<16x16xf32, #tpu.memory_space<vmem>>, vector<4x4xf32>
    %c0_36 = arith.constant 0 : index
    %c5 = arith.constant 5 : index
    %c0_37 = arith.constant 0 : index
    %c0_38 = arith.constant 0 : index
    %28 = vector.load %arg5[%c0_36, %c5, %c0_37, %c0_38] : memref<1x16x4x4xf32, #tpu.memory_space<vmem>>, vector<1x1x4x4xf32>
    %29 = vector.shape_cast %28 : vector<1x1x4x4xf32> to vector<4x4xf32>
    %30 = vector.shape_cast %27 : vector<4x4xf32> to vector<1x1x4x4xf32>
    tpu.vector_store %arg5[%c0_36, %c5, %c0_37, %c0_38], %30 {strides = array<i32>} : memref<1x16x4x4xf32, #tpu.memory_space<vmem>>, vector<1x1x4x4xf32>,
    %c4_39 = arith.constant 4 : index
    %c8_40 = arith.constant 8 : index
    %31 = vector.load %arg6[%c4_39, %c8_40] : memref<16x16xf32, #tpu.memory_space<vmem>>, vector<4x4xf32>
    %c0_41 = arith.constant 0 : index
    %c6 = arith.constant 6 : index
    %c0_42 = arith.constant 0 : index
    %c0_43 = arith.constant 0 : index
    %32 = vector.load %arg5[%c0_41, %c6, %c0_42, %c0_43] : memref<1x16x4x4xf32, #tpu.memory_space<vmem>>, vector<1x1x4x4xf32>
    %33 = vector.shape_cast %32 : vector<1x1x4x4xf32> to vector<4x4xf32>
    %34 = vector.shape_cast %31 : vector<4x4xf32> to vector<1x1x4x4xf32>
    tpu.vector_store %arg5[%c0_41, %c6, %c0_42, %c0_43], %34 {strides = array<i32>} : memref<1x16x4x4xf32, #tpu.memory_space<vmem>>, vector<1x1x4x4xf32>,
    %c4_44 = arith.constant 4 : index
    %c12_45 = arith.constant 12 : index
    %35 = vector.load %arg6[%c4_44, %c12_45] : memref<16x16xf32, #tpu.memory_space<vmem>>, vector<4x4xf32>
    %c0_46 = arith.constant 0 : index
    %c7 = arith.constant 7 : index
    %c0_47 = arith.constant 0 : index
    %c0_48 = arith.constant 0 : index
    %36 = vector.load %arg5[%c0_46, %c7, %c0_47, %c0_48] : memref<1x16x4x4xf32, #tpu.memory_space<vmem>>, vector<1x1x4x4xf32>
    %37 = vector.shape_cast %36 : vector<1x1x4x4xf32> to vector<4x4xf32>
    %38 = vector.shape_cast %35 : vector<4x4xf32> to vector<1x1x4x4xf32>
    tpu.vector_store %arg5[%c0_46, %c7, %c0_47, %c0_48], %38 {strides = array<i32>} : memref<1x16x4x4xf32, #tpu.memory_space<vmem>>, vector<1x1x4x4xf32>,
    %c8_49 = arith.constant 8 : index
    %c0_50 = arith.constant 0 : index
    %39 = vector.load %arg6[%c8_49, %c0_50] : memref<16x16xf32, #tpu.memory_space<vmem>>, vector<4x4xf32>
    %c0_51 = arith.constant 0 : index
    %c8_52 = arith.constant 8 : index
    %c0_53 = arith.constant 0 : index
    %c0_54 = arith.constant 0 : index
    %40 = vector.load %arg5[%c0_51, %c8_52, %c0_53, %c0_54] : memref<1x16x4x4xf32, #tpu.memory_space<vmem>>, vector<1x1x4x4xf32>
    %41 = vector.shape_cast %40 : vector<1x1x4x4xf32> to vector<4x4xf32>
    %42 = vector.shape_cast %39 : vector<4x4xf32> to vector<1x1x4x4xf32>
    tpu.vector_store %arg5[%c0_51, %c8_52, %c0_53, %c0_54], %42 {strides = array<i32>} : memref<1x16x4x4xf32, #tpu.memory_space<vmem>>, vector<1x1x4x4xf32>,
    %c8_55 = arith.constant 8 : index
    %c4_56 = arith.constant 4 : index
    %43 = vector.load %arg6[%c8_55, %c4_56] : memref<16x16xf32, #tpu.memory_space<vmem>>, vector<4x4xf32>
    %c0_57 = arith.constant 0 : index
    %c9 = arith.constant 9 : index
    %c0_58 = arith.constant 0 : index
    %c0_59 = arith.constant 0 : index
    %44 = vector.load %arg5[%c0_57, %c9, %c0_58, %c0_59] : memref<1x16x4x4xf32, #tpu.memory_space<vmem>>, vector<1x1x4x4xf32>
    %45 = vector.shape_cast %44 : vector<1x1x4x4xf32> to vector<4x4xf32>
    %46 = vector.shape_cast %43 : vector<4x4xf32> to vector<1x1x4x4xf32>
    tpu.vector_store %arg5[%c0_57, %c9, %c0_58, %c0_59], %46 {strides = array<i32>} : memref<1x16x4x4xf32, #tpu.memory_space<vmem>>, vector<1x1x4x4xf32>,
    %c8_60 = arith.constant 8 : index
    %c8_61 = arith.constant 8 : index
    %47 = vector.load %arg6[%c8_60, %c8_61] : memref<16x16xf32, #tpu.memory_space<vmem>>, vector<4x4xf32>
    %c0_62 = arith.constant 0 : index
    %c10 = arith.constant 10 : index
    %c0_63 = arith.constant 0 : index
    %c0_64 = arith.constant 0 : index
    %48 = vector.load %arg5[%c0_62, %c10, %c0_63, %c0_64] : memref<1x16x4x4xf32, #tpu.memory_space<vmem>>, vector<1x1x4x4xf32>
    %49 = vector.shape_cast %48 : vector<1x1x4x4xf32> to vector<4x4xf32>
    %50 = vector.shape_cast %47 : vector<4x4xf32> to vector<1x1x4x4xf32>
    tpu.vector_store %arg5[%c0_62, %c10, %c0_63, %c0_64], %50 {strides = array<i32>} : memref<1x16x4x4xf32, #tpu.memory_space<vmem>>, vector<1x1x4x4xf32>,
    %c8_65 = arith.constant 8 : index
    %c12_66 = arith.constant 12 : index
    %51 = vector.load %arg6[%c8_65, %c12_66] : memref<16x16xf32, #tpu.memory_space<vmem>>, vector<4x4xf32>
    %c0_67 = arith.constant 0 : index
    %c11 = arith.constant 11 : index
    %c0_68 = arith.constant 0 : index
    %c0_69 = arith.constant 0 : index
    %52 = vector.load %arg5[%c0_67, %c11, %c0_68, %c0_69] : memref<1x16x4x4xf32, #tpu.memory_space<vmem>>, vector<1x1x4x4xf32>
    %53 = vector.shape_cast %52 : vector<1x1x4x4xf32> to vector<4x4xf32>
    %54 = vector.shape_cast %51 : vector<4x4xf32> to vector<1x1x4x4xf32>
    tpu.vector_store %arg5[%c0_67, %c11, %c0_68, %c0_69], %54 {strides = array<i32>} : memref<1x16x4x4xf32, #tpu.memory_space<vmem>>, vector<1x1x4x4xf32>,
    %c12_70 = arith.constant 12 : index
    %c0_71 = arith.constant 0 : index
    %55 = vector.load %arg6[%c12_70, %c0_71] : memref<16x16xf32, #tpu.memory_space<vmem>>, vector<4x4xf32>
    %c0_72 = arith.constant 0 : index
    %c12_73 = arith.constant 12 : index
    %c0_74 = arith.constant 0 : index
    %c0_75 = arith.constant 0 : index
    %56 = vector.load %arg5[%c0_72, %c12_73, %c0_74, %c0_75] : memref<1x16x4x4xf32, #tpu.memory_space<vmem>>, vector<1x1x4x4xf32>
    %57 = vector.shape_cast %56 : vector<1x1x4x4xf32> to vector<4x4xf32>
    %58 = vector.shape_cast %55 : vector<4x4xf32> to vector<1x1x4x4xf32>
    tpu.vector_store %arg5[%c0_72, %c12_73, %c0_74, %c0_75], %58 {strides = array<i32>} : memref<1x16x4x4xf32, #tpu.memory_space<vmem>>, vector<1x1x4x4xf32>,
    %c12_76 = arith.constant 12 : index
    %c4_77 = arith.constant 4 : index
    %59 = vector.load %arg6[%c12_76, %c4_77] : memref<16x16xf32, #tpu.memory_space<vmem>>, vector<4x4xf32>
    %c0_78 = arith.constant 0 : index
    %c13 = arith.constant 13 : index
    %c0_79 = arith.constant 0 : index
    %c0_80 = arith.constant 0 : index
    %60 = vector.load %arg5[%c0_78, %c13, %c0_79, %c0_80] : memref<1x16x4x4xf32, #tpu.memory_space<vmem>>, vector<1x1x4x4xf32>
    %61 = vector.shape_cast %60 : vector<1x1x4x4xf32> to vector<4x4xf32>
    %62 = vector.shape_cast %59 : vector<4x4xf32> to vector<1x1x4x4xf32>
    tpu.vector_store %arg5[%c0_78, %c13, %c0_79, %c0_80], %62 {strides = array<i32>} : memref<1x16x4x4xf32, #tpu.memory_space<vmem>>, vector<1x1x4x4xf32>,
    %c12_81 = arith.constant 12 : index
    %c8_82 = arith.constant 8 : index
    %63 = vector.load %arg6[%c12_81, %c8_82] : memref<16x16xf32, #tpu.memory_space<vmem>>, vector<4x4xf32>
    %c0_83 = arith.constant 0 : index
    %c14 = arith.constant 14 : index
    %c0_84 = arith.constant 0 : index
    %c0_85 = arith.constant 0 : index
    %64 = vector.load %arg5[%c0_83, %c14, %c0_84, %c0_85] : memref<1x16x4x4xf32, #tpu.memory_space<vmem>>, vector<1x1x4x4xf32>
    %65 = vector.shape_cast %64 : vector<1x1x4x4xf32> to vector<4x4xf32>
    %66 = vector.shape_cast %63 : vector<4x4xf32> to vector<1x1x4x4xf32>
    tpu.vector_store %arg5[%c0_83, %c14, %c0_84, %c0_85], %66 {strides = array<i32>} : memref<1x16x4x4xf32, #tpu.memory_space<vmem>>, vector<1x1x4x4xf32>,
    %c12_86 = arith.constant 12 : index
    %c12_87 = arith.constant 12 : index
    %67 = vector.load %arg6[%c12_86, %c12_87] : memref<16x16xf32, #tpu.memory_space<vmem>>, vector<4x4xf32>
    %c0_88 = arith.constant 0 : index
    %c15 = arith.constant 15 : index
    %c0_89 = arith.constant 0 : index
    %c0_90 = arith.constant 0 : index
    %68 = vector.load %arg5[%c0_88, %c15, %c0_89, %c0_90] : memref<1x16x4x4xf32, #tpu.memory_space<vmem>>, vector<1x1x4x4xf32>
    %69 = vector.shape_cast %68 : vector<1x1x4x4xf32> to vector<4x4xf32>
    %70 = vector.shape_cast %67 : vector<4x4xf32> to vector<1x1x4x4xf32>
    tpu.vector_store %arg5[%c0_88, %c15, %c0_89, %c0_90], %70 {strides = array<i32>} : memref<1x16x4x4xf32, #tpu.memory_space<vmem>>, vector<1x1x4x4xf32>,
    return
  }
  func.func @transform_0(%arg0: i32, %arg1: i32) -> (i32, i32, i32, i32) {
    %c0_i32 = arith.constant 0 : i32
    %c0_i32_0 = arith.constant 0 : i32
    %c0_i32_1 = arith.constant 0 : i32
    return %arg0, %arg1, %c0_i32, %c0_i32_0 : i32, i32, i32, i32
  }
  func.func @transform_1(%arg0: i32, %arg1: i32) -> (i32, i32) {
    %c0_i32 = arith.constant 0 : i32
    %c0_i32_0 = arith.constant 0 : i32
    %c0_i32_1 = arith.constant 0 : i32
    return %c0_i32, %c0_i32_0 : i32, i32
  }
  func.func @transform_2(%arg0: i32, %arg1: i32) -> (i32, i32) {
    %c0_i32 = arith.constant 0 : i32
    %c0_i32_0 = arith.constant 0 : i32
    %c0_i32_1 = arith.constant 0 : i32
    return %c0_i32, %c0_i32_0 : i32, i32
  }
  func.func @transform_3(%arg0: i32, %arg1: i32) -> (i32, i32, i32, i32) {
    %c0_i32 = arith.constant 0 : i32
    %c0_i32_0 = arith.constant 0 : i32
    %c0_i32_1 = arith.constant 0 : i32
    return %arg0, %arg1, %c0_i32, %c0_i32_0 : i32, i32, i32, i32
  }
}

</mosaic_0001>

<llo_original>
// kernel: tpu_custom_call.1
$region0: #{tpu_custom_call.1}
  #allocation0 [shape = 'u32[]', space=smem, size = 0x4, offset = 0x4, fixed_abs, tag = 'smem constant byte address 0x4 - core index']
  #allocation1 [shape = 'u32[144,128]{1,0:T(1,128)}', space=vmem, size = 0x12000, scoped, tag = 'internal scratch']
  #allocation2 [shape = 'f32[16,16]{1,0:T(8,128)}', space=vmem, size = 0x2000, scoped, tag = 'scratch operand']
  %s0 = inlined_call_operand.hbm [shape: f32[2,3,16,16], index: 0, kind: input, shape index: {}]
  %s1 = inlined_call_operand.hbm [shape: f32[16,16], index: 1, kind: input, shape index: {}]
  %s2 = inlined_call_operand.hbm [shape: f32[16,16], index: 2, kind: input, shape index: {}]
  %s3 = inlined_call_operand.vmem [shape: f32[2,48,4,4], index: 3, kind: output, shape index: {}]
  %s4 = sld [smem:[#allocation0]]
  $region57: #{tpu_custom_call.1} parent=0
    _
  %s6 = ssub.s32 1, %s4
  %s7 = scalar_select 0, %s6, %s4
  $region1: #{tpu_custom_call.1} parent=0
    #allocation3 [shape = 'u8[16384]{0}', space=vmem, size = 0x4000, scoped, tag = 'input window, operand 0']
    #allocation4 [shape = 's32[2]{0}', space=sflag, size = 0x8, scoped, tag = 'scoped memory for tpu_custom_call.1']
    #allocation5 [shape = 'u8[8192]{0}', space=vmem, size = 0x2000, scoped, tag = 'input window, operand 1, single buffered']
    #allocation6 [shape = 's32[1]{0}', space=sflag, size = 0x4, scoped, tag = 'scoped memory for tpu_custom_call.1']
    #allocation7 [shape = 'u8[8192]{0}', space=vmem, size = 0x2000, scoped, tag = 'input window, operand 2, single buffered']
    %8 = vsyncpa [#allocation4], 0
    %s9 = scalar_lea.sflag [#allocation4], 1
    %10 = vsyncpa %s9, 0
    %11 = vsyncpa [#allocation6], 0
    loop: start=0, step=1, limit=8
    $region2: #{tpu_custom_call.1} parent=1 // loop_pre_header
      _
    $region3: #{tpu_custom_call.1} parent=1 // loop_header
      %s13 = sphi 0, %s17
      %p14 = scmp.ge.s32.totalorder %s13, 8
      %s20 = sphi 0, %s32
      %s21 = sphi 0, %s28
      %s22 = sphi 0, %s20
      %s23 = sphi 0, %s21
      %s24 = sphi 0, %s22
      %s25 = sphi 0, %s23
      %s37 = sphi 0, %s39
      %s40 = sphi 0, %s37
      %s41 = sphi 0, %s40
      %s57 = sphi 0, %s41
      %s61 = sphi 0, %s61
      %s63 = sphi 0, %s61
      %s64 = sphi 0, %s63
      %s78 = sphi 0, %s64
      %s82 = sphi 0, %s82
      %s84 = sphi 0, %s82
      %s85 = sphi 0, %s84
      %s99 = sphi 0, %s85
      %s107 = sphi 0, %s109
      %s110 = sphi 0, %s107
      %s111 = sphi 0, %s110
      %s127 = sphi 0, %s111
    $region4: #{tpu_custom_call.1} parent=1 // loop_header_branch
      %16 = sbr.rel (%p14) target = $region8
    $region5: #{tpu_custom_call.1} parent=1 // loop_body
      %s18 = ssub.s32 %s13, 1
      %s19 = ssub.s32 %s13, 2
      %s26 = sadd.s32 1, %s21
      %p27 = scmp.ge.s32.totalorder %s26, 3
      %s28 = scalar_select %p27, 0, %s26
      %s29 = sadd.s32 1, %s20
      %s30 = scalar_select %p27, %s29, %s20
      %p31 = scmp.ge.s32.totalorder %s30, 2
      %s32 = scalar_select %p31, 0, %s30
      %s33 = ssub.s32 %s20, %s32
      %s34 = ssub.s32 %s21, %s28
      %s35 = sor.u32 %s33, %s34
      %p36 = scmp.eq.s32.totalorder %s35, 0
      %s38 = sadd.s32 %s37, 1
      %s39 = scalar_select %p36, %s37, %s38
      %p42 = pneg %p36
      %p43 = scmp.eq.s32.totalorder %s13, 5
      %p44 = por %p42, %p43
      %p45 = scmp.ne.s32.totalorder %s37, %s40
      %p46 = scmp.eq.s32.totalorder %s13, 0
      %p47 = por %p45, %p46
      %p48 = scmp.ne.s32.totalorder %s37, %s40
      %p49 = scmp.eq.s32.totalorder %s18, 5
      %p50 = por %p48, %p49
      %p51 = scmp.ne.s32.totalorder %s40, %s41
      %p52 = scmp.eq.s32.totalorder %s18, 0
      %p53 = por %p51, %p52
      %p54 = scmp.ne.s32.totalorder %s40, %s41
      %p55 = scmp.eq.s32.totalorder %s19, 5
      %p56 = por %p54, %p55
      %p58 = scmp.ne.s32.totalorder %s41, %s57
      %p59 = scmp.eq.s32.totalorder %s19, 0
      %p60 = por %p58, %p59
      %s62 = sadd.s32 %s61, 1
      %p65 = scmp.eq.s32.totalorder %s13, 5
      %p66 = scmp.ne.s32.totalorder %s61, %s63
      %p67 = scmp.eq.s32.totalorder %s13, 0
      %p68 = por %p66, %p67
      %p69 = scmp.ne.s32.totalorder %s61, %s63
      %p70 = scmp.eq.s32.totalorder %s18, 5
      %p71 = por %p69, %p70
      %p72 = scmp.ne.s32.totalorder %s63, %s64
      %p73 = scmp.eq.s32.totalorder %s18, 0
      %p74 = por %p72, %p73
      %p75 = scmp.ne.s32.totalorder %s63, %s64
      %p76 = scmp.eq.s32.totalorder %s19, 5
      %p77 = por %p75, %p76
      %p79 = scmp.ne.s32.totalorder %s64, %s78
      %p80 = scmp.eq.s32.totalorder %s19, 0
      %p81 = por %p79, %p80
      %s83 = sadd.s32 %s82, 1
      %p86 = scmp.eq.s32.totalorder %s13, 5
      %p87 = scmp.ne.s32.totalorder %s82, %s84
      %p88 = scmp.eq.s32.totalorder %s13, 0
      %p89 = por %p87, %p88
      %p90 = scmp.ne.s32.totalorder %s82, %s84
      %p91 = scmp.eq.s32.totalorder %s18, 5
      %p92 = por %p90, %p91
      %p93 = scmp.ne.s32.totalorder %s84, %s85
      %p94 = scmp.eq.s32.totalorder %s18, 0
      %p95 = por %p93, %p94
      %p96 = scmp.ne.s32.totalorder %s84, %s85
      %p97 = scmp.eq.s32.totalorder %s19, 5
      %p98 = por %p96, %p97
      %p100 = scmp.ne.s32.totalorder %s85, %s99
      %p101 = scmp.eq.s32.totalorder %s19, 0
      %p102 = por %p100, %p101
      %s103 = ssub.s32 %s20, %s32
      %s104 = ssub.s32 %s21, %s28
      %s105 = sor.u32 %s103, %s104
      %p106 = scmp.eq.s32.totalorder %s105, 0
      %s108 = sadd.s32 %s107, 1
      %s109 = scalar_select %p106, %s107, %s108
      %p112 = pneg %p106
      %p113 = scmp.eq.s32.totalorder %s13, 5
      %p114 = por %p112, %p113
      %p115 = scmp.ne.s32.totalorder %s107, %s110
      %p116 = scmp.eq.s32.totalorder %s13, 0
      %p117 = por %p115, %p116
      %p118 = scmp.ne.s32.totalorder %s107, %s110
      %p119 = scmp.eq.s32.totalorder %s18, 5
      %p120 = por %p118, %p119
      %p121 = scmp.ne.s32.totalorder %s110, %s111
      %p122 = scmp.eq.s32.totalorder %s18, 0
      %p123 = por %p121, %p122
      %p124 = scmp.ne.s32.totalorder %s110, %s111
      %p125 = scmp.eq.s32.totalorder %s19, 5
      %p126 = por %p124, %p125
      %p128 = scmp.ne.s32.totalorder %s111, %s127
      %p129 = scmp.eq.s32.totalorder %s19, 0
      %p130 = por %p128, %p129
      %p131 = scmp.le.s32.totalorder 1, %s13
      %p132 = scmp.lt.s32.totalorder %s13, 7
      %p133 = pnand %p131, %p132
      %p134 = pneg %p133
      // Predicated region
      $region9: #{tpu_custom_call.1} parent=5 // pred_check
        _
      $region10: #{tpu_custom_call.1} parent=5 // pred_check_branch
        %136 = sbr.rel (%p133) target = $region12
      $region11: #{tpu_custom_call.1} parent=5 // pred_region
        %s137 = ssub.s32 %s13, 1
        // Predicated region
        $region13: #{tpu_custom_call.1} parent=11 // pred_check
          %p138 = pneg %p74
        $region14: #{tpu_custom_call.1} parent=11 // pred_check_branch
          %140 = sbr.rel (%p138) target = $region16
        $region15: #{tpu_custom_call.1} parent=11 // pred_region
          %s142 = ssub.s32 256, 256
          %143 = vsyncadd [#allocation6], %s142
          %s144 = sshll.u32 [#allocation5], 4
          %s145 = int_to_ptr.vmem [resolvable:$true] %s144
          %150 = dma.hbm_to_vmem [thread:$0]  %s1, 256, %s145, [#allocation6], 128, 128, 8
        $region16: #{tpu_custom_call.1} parent=11 // pred_fallthru
          _
        // Predicated region
        $region17: #{tpu_custom_call.1} parent=11 // pred_check
          %p151 = pneg %p95
        $region18: #{tpu_custom_call.1} parent=11 // pred_check_branch
          %153 = sbr.rel (%p151) target = $region20
        $region19: #{tpu_custom_call.1} parent=11 // pred_region
          %s155 = ssub.s32 256, 256
          %156 = vsyncadd [#allocation6], %s155
          %s157 = sshll.u32 [#allocation7], 4
          %s158 = int_to_ptr.vmem [resolvable:$true] %s157
          %163 = dma.hbm_to_vmem [thread:$0]  %s2, 256, %s158, [#allocation6], 128, 128, 8
        $region20: #{tpu_custom_call.1} parent=11 // pred_fallthru
          _
      $region12: #{tpu_custom_call.1} parent=5 // pred_fallthru
        _
      %p164 = scmp.lt.s32.totalorder %s13, 6
      // Predicated region
      $region21: #{tpu_custom_call.1} parent=5 // pred_check
        %p165 = pneg %p164
      $region22: #{tpu_custom_call.1} parent=5 // pred_check_branch
        %167 = sbr.rel (%p165) target = $region24
      $region23: #{tpu_custom_call.1} parent=5 // pred_region
        // Predicated region
        $region25: #{tpu_custom_call.1} parent=23 // pred_check
          %p168 = pneg %p47
        $region26: #{tpu_custom_call.1} parent=23 // pred_check_branch
          %170 = sbr.rel (%p168) target = $region28
        $region27: #{tpu_custom_call.1} parent=23 // pred_region
          %s171 = sand.u32 %s37, 1
          %s172 = scalar_lea.sflag [#allocation4], %s171
          %s173 = sand.u32 %s37, 1
          %s174 = smul.addr %s173, 16
          %s175 = scalar_lea.vmem [#allocation3], %s174
          %s177 = ssub.s32 256, 256
          %178 = vsyncadd %s172, %s177
          %s179 = smul.addr %s21, 2
          %s180 = smul.addr %s20, 6
          %s181 = sadd.s32 %s179, %s180
          %s182 = smul.addr %s181, 128
          %s183 = scalar_lea.hbm %s0, %s182
          %s184 = sshll.u32 %s175, 4
          %s185 = int_to_ptr.vmem [resolvable:$true] %s184
          %190 = dma.hbm_to_vmem [thread:$0]  %s183, 256, %s185, %s172, 128, 128, 8
        $region28: #{tpu_custom_call.1} parent=23 // pred_fallthru
          _
      $region24: #{tpu_custom_call.1} parent=5 // pred_fallthru
        _
      %p191 = scmp.le.s32.totalorder 1, %s13
      %p192 = scmp.lt.s32.totalorder %s13, 7
      %p193 = pnand %p191, %p192
      %p194 = pneg %p193
      // Predicated region
      $region29: #{tpu_custom_call.1} parent=5 // pred_check
        _
      $region30: #{tpu_custom_call.1} parent=5 // pred_check_branch
        %196 = sbr.rel (%p193) target = $region32
      $region31: #{tpu_custom_call.1} parent=5 // pred_region
        %s197 = ssub.s32 %s13, 1
        %s198 = sand.u32 %s40, 1
        %s199 = scalar_lea.sflag [#allocation4], %s198
        %s200 = sand.u32 %s40, 1
        %s201 = smul.addr %s200, 16
        %s202 = scalar_lea.vmem [#allocation3], %s201
        // Predicated region
        $region33: #{tpu_custom_call.1} parent=31 // pred_check
          %p203 = pneg %p53
        $region34: #{tpu_custom_call.1} parent=31 // pred_check_branch
          %205 = sbr.rel (%p203) target = $region36
        $region35: #{tpu_custom_call.1} parent=31 // pred_region
          %206 = dma.done %s199, 256
        $region36: #{tpu_custom_call.1} parent=31 // pred_fallthru
          _
        // Predicated region
        $region37: #{tpu_custom_call.1} parent=31 // pred_check
          %p207 = pneg %p74
        $region38: #{tpu_custom_call.1} parent=31 // pred_check_branch
          %209 = sbr.rel (%p207) target = $region40
        $region39: #{tpu_custom_call.1} parent=31 // pred_region
          %210 = dma.done [#allocation6], 256
        $region40: #{tpu_custom_call.1} parent=31 // pred_fallthru
          _
        // Predicated region
        $region41: #{tpu_custom_call.1} parent=31 // pred_check
          %p211 = pneg %p95
        $region42: #{tpu_custom_call.1} parent=31 // pred_check_branch
          %213 = sbr.rel (%p211) target = $region44
        $region43: #{tpu_custom_call.1} parent=31 // pred_region
          %214 = dma.done [#allocation6], 256
        $region44: #{tpu_custom_call.1} parent=31 // pred_fallthru
          _
        %s215 = sand.u32 %s40, 1
        %s216 = scalar_lea.sflag [#allocation4], %s215
        %s217 = sand.u32 %s40, 1
        %s218 = smul.addr %s217, 16
        %s219 = scalar_lea.vmem [#allocation3], %s218
        %p220 = pneg %p53
        %p221 = pneg %p50
        %p222 = pneg %p74
        %p223 = pneg %p71
        %p224 = pneg %p95
        %p225 = pneg %p92
        %p226 = pneg %p123
        %p227 = pneg %p120
        %s228 = smul.u32 16, %s23
        %p229 = scmp.lt.s32.totalorder %s22, 1
        %s230 = scalar_select %p229, %s22, 1
        %p231 = scmp.lt.s32.totalorder %s228, 47
        %s232 = scalar_select %p231, %s228, 47
        %s233 = smul.addr %s230, 48
        %s234 = sadd.s32 %s232, %s233
        %s235 = smul.addr %s234, 4
        %s236 = scalar_lea.vmem %s3, %s235
        %s237 = smul.u32 16, %s23
        %p238 = scmp.lt.s32.totalorder %s22, 1
        %s239 = scalar_select %p238, %s22, 1
        %p240 = scmp.lt.s32.totalorder %s237, 47
        %s241 = scalar_select %p240, %s237, 47
        %s242 = smul.addr %s239, 48
        %s243 = sadd.s32 %s241, %s242
        %s244 = smul.addr %s243, 4
        %s245 = scalar_lea.vmem %s3, %s244
        %s246 = smul.u32 16, %s23
        %v247 = vld [vmem:[#allocation5] sm:$0xff]
        %v248 = vld [vmem:[#allocation5 + $0x8] sm:$0xff]
        %v249 = vld [vmem:[%s202] sm:$0xff]
        %v250 = vld [vmem:[%s202 + $0x8] sm:$0xff]
        %vm251 = vcmask 130048
        %v253 = vsel %vm251, %v247, 0
        %v256 = vsel %vm251, %v248, 0
        %258 = vmatprep.subr.mxu0 0.0
        %259 = vmatpush1.msra.mxu0 %v249
        %260 = vmatprep.subr.mxu0 0.0
        %261 = vmatpush1.msra.mxu0 %v250
        %262 = vmatprep.subr.mxu0 0.0
        %263 = vmatpush1.msra.mxu0 0.0
        %264 = vmatprep.subr.mxu0 0.0
        %265 = vmatpush1.msra.mxu0 0.0
        %266 = vmatprep.subr.mxu0 0.0
        %267 = vmatpush1.msra.mxu0 0.0
        %268 = vmatprep.subr.mxu0 0.0
        %269 = vmatpush1.msra.mxu0 0.0
        %270 = vmatprep.subr.mxu0 0.0
        %271 = vmatpush1.msra.mxu0 0.0
        %272 = vmatprep.subr.mxu0 0.0
        %273 = vmatpush1.msra.mxu0 0.0
        %274 = vmatprep.subr.mxu0 0.0
        %275 = vmatpush1.msra.mxu0 0.0
        %276 = vmatprep.subr.mxu0 0.0
        %277 = vmatpush1.msra.mxu0 0.0
        %278 = vmatprep.subr.mxu0 0.0
        %279 = vmatpush1.msra.mxu0 0.0
        %280 = vmatprep.subr.mxu0 0.0
        %281 = vmatpush1.msra.mxu0 0.0
        %282 = vmatprep.subr.mxu0 0.0
        %283 = vmatpush1.msra.mxu0 0.0
        %284 = vmatprep.subr.mxu0 0.0
        %285 = vmatpush1.msra.mxu0 0.0
        %286 = vmatprep.subr.mxu0 0.0
        %287 = vmatpush1.msra.mxu0 0.0
        %288 = vmatprep.subr.mxu0 0.0
        %289 = vmatpush1.msra.mxu0 0.0
        %290 = vmatprep.subr.mxu0 0.0
        %291 = vmatpush1.msra.mxu0 0.0
        %292 = vmatprep.subr.mxu0 0.0
        %293 = vmatpush1.msra.mxu0 0.0
        %294 = vmatprep.subr.mxu0 0.0
        %295 = vmatpush1.msra.mxu0 0.0
        %296 = vmatprep.subr.mxu0 0.0
        %297 = vmatpush1.msra.mxu0 0.0
        %298 = vmatprep.subr.mxu0 0.0
        %299 = vmatpush1.msra.mxu0 0.0
        %300 = vmatprep.subr.mxu0 0.0
        %301 = vmatpush1.msra.mxu0 0.0
        %302 = vmatprep.subr.mxu0 0.0
        %303 = vmatpush1.msra.mxu0 0.0
        %304 = vmatprep.subr.mxu0 0.0
        %305 = vmatpush1.msra.mxu0 0.0
        %306 = vmatprep.subr.mxu0 0.0
        %307 = vmatpush1.msra.mxu0 0.0
        %308 = vmatprep.subr.mxu0 0.0
        %309 = vmatpush1.msra.mxu0 0.0
        %310 = vmatprep.subr.mxu0 0.0
        %311 = vmatpush1.msra.mxu0 0.0
        %312 = vmatprep.subr.mxu0 0.0
        %313 = vmatpush1.msra.mxu0 0.0
        %314 = vmatprep.subr.mxu0 0.0
        %315 = vmatpush1.msra.mxu0 0.0
        %316 = vmatprep.subr.mxu0 0.0
        %317 = vmatpush1.msra.mxu0 0.0
        %318 = vmatprep.subr.mxu0 0.0
        %319 = vmatpush1.msra.mxu0 0.0
        %320 = vmatprep.subr.mxu0 0.0
        %321 = vmatpush1.msra.mxu0 0.0
        %322 = vmatprep.mubr.f32.mxu0 0.0
        %323 = vmatmul.mubr.f32.gmra.mrb[0].mxu0 %v253
        %v324 = vpop.f32.mrb[0].mxu0
        %v325 = vadd.f32 0.0, %v324
        %v326 = vpop.f32.mrb[0].mxu0
        %327 = vmatprep.mubr.f32.mxu0 0.0
        %328 = vmatmul.mubr.f32.gmra.mrb[0].mxu0 %v256
        %v329 = vpop.f32.mrb[0].mxu0
        %v330 = vadd.f32 0.0, %v329
        %v331 = vpop.f32.mrb[0].mxu0
        %332 = vdwg.mxu0
        %v333 = vld [vmem:[#allocation7] sm:$0xff]
        %v334 = vld [vmem:[#allocation7 + $0x8] sm:$0xff]
        %v336 = vsel %vm251, %v325, 0
        %v339 = vsel %vm251, %v330, 0
        %341 = vmatprep.subr.mxu0 0.0
        %342 = vmatpush1.msra.mxu0 %v333
        %343 = vmatprep.subr.mxu0 0.0
        %344 = vmatpush1.msra.mxu0 %v334
        %345 = vmatprep.subr.mxu0 0.0
        %346 = vmatpush1.msra.mxu0 0.0
        %347 = vmatprep.subr.mxu0 0.0
        %348 = vmatpush1.msra.mxu0 0.0
        %349 = vmatprep.subr.mxu0 0.0
        %350 = vmatpush1.msra.mxu0 0.0
        %351 = vmatprep.subr.mxu0 0.0
        %352 = vmatpush1.msra.mxu0 0.0
        %353 = vmatprep.subr.mxu0 0.0
        %354 = vmatpush1.msra.mxu0 0.0
        %355 = vmatprep.subr.mxu0 0.0
        %356 = vmatpush1.msra.mxu0 0.0
        %357 = vmatprep.subr.mxu0 0.0
        %358 = vmatpush1.msra.mxu0 0.0
        %359 = vmatprep.subr.mxu0 0.0
        %360 = vmatpush1.msra.mxu0 0.0
        %361 = vmatprep.subr.mxu0 0.0
        %362 = vmatpush1.msra.mxu0 0.0
        %363 = vmatprep.subr.mxu0 0.0
        %364 = vmatpush1.msra.mxu0 0.0
        %365 = vmatprep.subr.mxu0 0.0
        %366 = vmatpush1.msra.mxu0 0.0
        %367 = vmatprep.subr.mxu0 0.0
        %368 = vmatpush1.msra.mxu0 0.0
        %369 = vmatprep.subr.mxu0 0.0
        %370 = vmatpush1.msra.mxu0 0.0
        %371 = vmatprep.subr.mxu0 0.0
        %372 = vmatpush1.msra.mxu0 0.0
        %373 = vmatprep.subr.mxu0 0.0
        %374 = vmatpush1.msra.mxu0 0.0
        %375 = vmatprep.subr.mxu0 0.0
        %376 = vmatpush1.msra.mxu0 0.0
        %377 = vmatprep.subr.mxu0 0.0
        %378 = vmatpush1.msra.mxu0 0.0
        %379 = vmatprep.subr.mxu0 0.0
        %380 = vmatpush1.msra.mxu0 0.0
        %381 = vmatprep.subr.mxu0 0.0
        %382 = vmatpush1.msra.mxu0 0.0
        %383 = vmatprep.subr.mxu0 0.0
        %384 = vmatpush1.msra.mxu0 0.0
        %385 = vmatprep.subr.mxu0 0.0
        %386 = vmatpush1.msra.mxu0 0.0
        %387 = vmatprep.subr.mxu0 0.0
        %388 = vmatpush1.msra.mxu0 0.0
        %389 = vmatprep.subr.mxu0 0.0
        %390 = vmatpush1.msra.mxu0 0.0
        %391 = vmatprep.subr.mxu0 0.0
        %392 = vmatpush1.msra.mxu0 0.0
        %393 = vmatprep.subr.mxu0 0.0
        %394 = vmatpush1.msra.mxu0 0.0
        %395 = vmatprep.subr.mxu0 0.0
        %396 = vmatpush1.msra.mxu0 0.0
        %397 = vmatprep.subr.mxu0 0.0
        %398 = vmatpush1.msra.mxu0 0.0
        %399 = vmatprep.subr.mxu0 0.0
        %400 = vmatpush1.msra.mxu0 0.0
        %401 = vmatprep.subr.mxu0 0.0
        %402 = vmatpush1.msra.mxu0 0.0
        %403 = vmatprep.subr.mxu0 0.0
        %404 = vmatpush1.msra.mxu0 0.0
        %405 = vmatprep.mubr.f32.mxu0 0.0
        %406 = vmatmul.mubr.f32.gmra.mrb[0].mxu0 %v336
        %v407 = vpop.f32.mrb[0].mxu0
        %v408 = vadd.f32 0.0, %v407
        %v409 = vpop.f32.mrb[0].mxu0
        %410 = vmatprep.mubr.f32.mxu0 0.0
        %411 = vmatmul.mubr.f32.gmra.mrb[0].mxu0 %v339
        %v412 = vpop.f32.mrb[0].mxu0
        %v413 = vadd.f32 0.0, %v412
        %v414 = vpop.f32.mrb[0].mxu0
        %415 = vdwg.mxu0
        %416 = vst.msk [vmem:[#allocation2] sm:$0xff] %vm251, %v408
        %417 = vst.msk [vmem:[#allocation2 + $0x8] sm:$0xff] %vm251, %v413
        %v418 = vld [vmem:[#allocation2] sm:$0xf]
        %vm419 = vcmask 27648
        %420 = vst.msk [vmem:[%s245] sm:$0xf] %vm419, %v418
        %v421 = vld [vmem:[#allocation2] sm:$0xf]
        %423 = vrot.lane.b32.xlu0 %v421, 124
        %v424 = vpop.permute.xlu0 %423
        %s426 = scalar_lea.vmem %s245, 4
        %427 = vst.msk [vmem:[%s426] sm:$0xf] %vm419, %v424
        %v428 = vld [vmem:[#allocation2] sm:$0xf]
        %430 = vrot.lane.b32.xlu0 %v428, 120
        %v431 = vpop.permute.xlu0 %430
        %s433 = scalar_lea.vmem %s245, 8
        %434 = vst.msk [vmem:[%s433] sm:$0xf] %vm419, %v431
        %v435 = vld [vmem:[#allocation2] sm:$0xf]
        %437 = vrot.lane.b32.xlu0 %v435, 116
        %v438 = vpop.permute.xlu0 %437
        %s440 = scalar_lea.vmem %s245, 12
        %441 = vst.msk [vmem:[%s440] sm:$0xf] %vm419, %v438
        %v442 = vld [vmem:[#allocation2 + $0x4] sm:$0xf]
        %s443 = scalar_lea.vmem %s245, 16
        %444 = vst.msk [vmem:[%s443] sm:$0xf] %vm419, %v442
        %v445 = vld [vmem:[#allocation2 + $0x4] sm:$0xf]
        %447 = vrot.lane.b32.xlu0 %v445, 124
        %v448 = vpop.permute.xlu0 %447
        %s450 = scalar_lea.vmem %s245, 20
        %451 = vst.msk [vmem:[%s450] sm:$0xf] %vm419, %v448
        %v452 = vld [vmem:[#allocation2 + $0x4] sm:$0xf]
        %454 = vrot.lane.b32.xlu0 %v452, 120
        %v455 = vpop.permute.xlu0 %454
        %s457 = scalar_lea.vmem %s245, 24
        %458 = vst.msk [vmem:[%s457] sm:$0xf] %vm419, %v455
        %v459 = vld [vmem:[#allocation2 + $0x4] sm:$0xf]
        %461 = vrot.lane.b32.xlu0 %v459, 116
        %v462 = vpop.permute.xlu0 %461
        %s464 = scalar_lea.vmem %s245, 28
        %465 = vst.msk [vmem:[%s464] sm:$0xf] %vm419, %v462
        %v466 = vld [vmem:[#allocation2 + $0x8] sm:$0xf]
        %s467 = scalar_lea.vmem %s245, 32
        %468 = vst.msk [vmem:[%s467] sm:$0xf] %vm419, %v466
        %v469 = vld [vmem:[#allocation2 + $0x8] sm:$0xf]
        %471 = vrot.lane.b32.xlu0 %v469, 124
        %v472 = vpop.permute.xlu0 %471
        %s474 = scalar_lea.vmem %s245, 36
        %475 = vst.msk [vmem:[%s474] sm:$0xf] %vm419, %v472
        %v476 = vld [vmem:[#allocation2 + $0x8] sm:$0xf]
        %478 = vrot.lane.b32.xlu0 %v476, 120
        %v479 = vpop.permute.xlu0 %478
        %s481 = scalar_lea.vmem %s245, 40
        %482 = vst.msk [vmem:[%s481] sm:$0xf] %vm419, %v479
        %v483 = vld [vmem:[#allocation2 + $0x8] sm:$0xf]
        %485 = vrot.lane.b32.xlu0 %v483, 116
        %v486 = vpop.permute.xlu0 %485
        %s488 = scalar_lea.vmem %s245, 44
        %489 = vst.msk [vmem:[%s488] sm:$0xf] %vm419, %v486
        %v490 = vld [vmem:[#allocation2 + $0xc] sm:$0xf]
        %s491 = scalar_lea.vmem %s245, 48
        %492 = vst.msk [vmem:[%s491] sm:$0xf] %vm419, %v490
        %v493 = vld [vmem:[#allocation2 + $0xc] sm:$0xf]
        %495 = vrot.lane.b32.xlu0 %v493, 124
        %v496 = vpop.permute.xlu0 %495
        %s498 = scalar_lea.vmem %s245, 52
        %499 = vst.msk [vmem:[%s498] sm:$0xf] %vm419, %v496
        %v500 = vld [vmem:[#allocation2 + $0xc] sm:$0xf]
        %502 = vrot.lane.b32.xlu0 %v500, 120
        %v503 = vpop.permute.xlu0 %502
        %s505 = scalar_lea.vmem %s245, 56
        %506 = vst.msk [vmem:[%s505] sm:$0xf] %vm419, %v503
        %v507 = vld [vmem:[#allocation2 + $0xc] sm:$0xf]
        %509 = vrot.lane.b32.xlu0 %v507, 116
        %v510 = vpop.permute.xlu0 %509
        %s512 = scalar_lea.vmem %s245, 60
        %513 = vst.msk [vmem:[%s512] sm:$0xf] %vm419, %v510
        %s514 = smul.u32 16, %s23
        %p515 = scmp.lt.s32.totalorder %s22, 1
        %s516 = scalar_select %p515, %s22, 1
        %p517 = scmp.lt.s32.totalorder %s514, 47
        %s518 = scalar_select %p517, %s514, 47
        %s519 = smul.addr %s516, 48
        %s520 = sadd.s32 %s518, %s519
        %s521 = smul.addr %s520, 4
        %s522 = scalar_lea.vmem %s3, %s521
        // Predicated region
        $region45: #{tpu_custom_call.1} parent=31 // pred_check
          %p523 = pneg %p120
        $region46: #{tpu_custom_call.1} parent=31 // pred_check_branch
          %525 = sbr.rel (%p523) target = $region48
        $region47: #{tpu_custom_call.1} parent=31 // pred_region
          %s526 = smul.u32 16, %s23
        $region48: #{tpu_custom_call.1} parent=31 // pred_fallthru
          _
      $region32: #{tpu_custom_call.1} parent=5 // pred_fallthru
        _
      %p527 = scmp.le.s32.totalorder 2, %s13
      // Predicated region
      $region49: #{tpu_custom_call.1} parent=5 // pred_check
        %p528 = pneg %p527
      $region50: #{tpu_custom_call.1} parent=5 // pred_check_branch
        %530 = sbr.rel (%p528) target = $region52
      $region51: #{tpu_custom_call.1} parent=5 // pred_region
        %s531 = ssub.s32 %s13, 2
        // Predicated region
        $region53: #{tpu_custom_call.1} parent=51 // pred_check
          %p532 = pneg %p126
        $region54: #{tpu_custom_call.1} parent=51 // pred_check_branch
          %534 = sbr.rel (%p532) target = $region56
        $region55: #{tpu_custom_call.1} parent=51 // pred_region
          %s535 = smul.u32 16, %s25
          %p536 = scmp.lt.s32.totalorder %s24, 1
          %s537 = scalar_select %p536, %s24, 1
          %p538 = scmp.lt.s32.totalorder %s535, 47
          %s539 = scalar_select %p538, %s535, 47
          %s540 = smul.addr %s537, 48
          %s541 = sadd.s32 %s539, %s540
          %s542 = smul.addr %s541, 4
          %s543 = scalar_lea.vmem %s3, %s542
        $region56: #{tpu_custom_call.1} parent=51 // pred_fallthru
          _
      $region52: #{tpu_custom_call.1} parent=5 // pred_fallthru
        _
    $region6: #{tpu_custom_call.1} parent=1 // loop_footer
      %s17 = sadd.s32 1, %s13
    $region7: #{tpu_custom_call.1} parent=1 // loop_footer_branch
      %12 = sbr.rel target = $region3
    $region8: #{tpu_custom_call.1} parent=1 // loop_exit
      _
    %544 = vsyncpa [#allocation4], 1
    %s545 = scalar_lea.sflag [#allocation4], 1
    %546 = vsyncpa %s545, 1
    %547 = vsyncpa [#allocation6], 1

</llo_original>
